<compile_context>
chip_gen: v6e
topology: v6e:2x2x1
jax: 0.10.0
libtpu: 0.0.40
codegen_flags: <defaults>
</compile_context>

<pallas_src>
import functools
import math

import numpy as np
import jax
import jax.numpy as jnp
from jax.experimental import pallas as pl
from jax.experimental.pallas import tpu as pltpu


LN_EPS = 1e-6                      # matches partial(nn.LayerNorm, eps=1e-6)


# ---------------------------------------------------------------------------
# Small configuration / helper layer
# ---------------------------------------------------------------------------
class _Cfg:
    # Grid-constant operands are single-buffered (pl.Buffered(1)) to halve their
    # VMEM residency; flipped to False automatically (see __main__) if this JAX
    # build rejects pipeline_mode / Buffered(1).
    single_buffer_weights = True


def _const_nbuf():
    return 1 if _Cfg.single_buffer_weights else 2


def _wspec(shape, index_map):
    """BlockSpec for a grid-constant operand (weights / biases / LN params)."""
    if _Cfg.single_buffer_weights:
        return pl.BlockSpec(shape, index_map, pipeline_mode=pl.Buffered(1))
    return pl.BlockSpec(shape, index_map)


def _nbytes(shape, dtype):
    return math.prod(shape) * np.dtype(dtype).itemsize


def _vmem_limit(entries):
    """Per-kernel scoped-VMEM budget from the actual buffers
    (block bytes x buffer count) + 50% headroom, clamped to v7x's 64 MiB."""
    total = sum(_nbytes(s, d) * n for s, d, n in entries)
    return int(min(max(total * 1.5 + (2 << 20), 4 << 20), 64 << 20))


def _cparams(dims, entries):
    return pltpu.CompilerParams(dimension_semantics=dims,
                                vmem_limit_bytes=_vmem_limit(entries))


def _row_tile(n, max_tile=256):
    """Token/patch-row tile: full dim when small, else a 128-multiple divisor."""
    if n <= max_tile:
        return n
    for t in (256, 128):
        if n % t == 0:
            return t
    # TODO(synk): pad N (e.g. 197 -> 256) with key masking at real ViT shapes so
    # clean 128-row tiling / unmasked stores become possible.
    return n


def _hidden_tile(h, max_tile=1024):
    if h <= max_tile:
        return h
    for t in (1024, 768, 512, 384, 256, 128):
        if h % t == 0:
            return t
    return h


# ---------------------------------------------------------------------------
# Math helpers shared by the kernels and the pure-JAX reference.
# ---------------------------------------------------------------------------
def _layernorm(x, gamma, beta, eps=LN_EPS):
    x = x.astype(jnp.float32)
    mean = jnp.mean(x, axis=-1, keepdims=True)
    xc = x - mean
    var = jnp.mean(xc * xc, axis=-1, keepdims=True)
    return xc * jax.lax.rsqrt(var + eps) * gamma + beta


def _gelu(x):
    # TODO(synk): nn.GELU defaults to the exact erf form; the tanh approximation
    # is used here (EUP-friendly, ~1e-3 max deviation).  Reference uses the same.
    c = math.sqrt(2.0 / math.pi)
    return 0.5 * x * (1.0 + jnp.tanh(c * (x + 0.044715 * x * x * x)))


def _patchify(x, patch):
    """(B, Cin, H, W) -> (B, num_patches, Cin*patch*patch): the input gathering
    of the stride=patch Conv2d in PatchEmbed (pure layout plumbing)."""
    B, Cin, H, W = x.shape
    gh, gw = H // patch, W // patch
    x = x.reshape(B, Cin, gh, patch, gw, patch)
    x = x.transpose(0, 2, 4, 1, 3, 5)
    return x.reshape(B, gh * gw, Cin * patch * patch)


# ---------------------------------------------------------------------------
# 1) Patch embedding: one matmul per (batch, patch-row tile).
# ---------------------------------------------------------------------------
def _patch_embed_kernel(p_ref, w_ref, b_ref, o_ref):
    y = jnp.dot(p_ref[0].astype(w_ref.dtype), w_ref[...],
                preferred_element_type=jnp.float32) + b_ref[...]
    o_ref[0] = y.astype(o_ref.dtype)


def _patch_embed(patches, w_patch, b_patch):
    B, P, K = patches.shape
    C = w_patch.shape[1]
    tp = _row_tile(P)
    nbc = _const_nbuf()
    entries = [((1, tp, K), patches.dtype, 2),
               ((K, C), w_patch.dtype, nbc),
               ((1, C), b_patch.dtype, nbc),
               ((1, tp, C), jnp.float32, 2)]
    return pl.pallas_call(
        _patch_embed_kernel,
        out_shape=jax.ShapeDtypeStruct((B, P, C), jnp.float32),
        grid_spec=pltpu.PrefetchScalarGridSpec(
            num_scalar_prefetch=0,
            grid=(B, P // tp),
            in_specs=[
                pl.BlockSpec((1, tp, K), lambda b, i: (b, i, 0)),
                _wspec((K, C), lambda b, i: (0, 0)),
                _wspec((1, C), lambda b, i: (0, 0)),
            ],
            out_specs=pl.BlockSpec((1, tp, C), lambda b, i: (b, i, 0)),
        ),
        compiler_params=_cparams(("parallel", "parallel"), entries),
    )(patches, w_patch, b_patch)


# ---------------------------------------------------------------------------
# 2a) Attention kernel: LN1 + fused QKV + per-head attention + ONE projection
#     + residual, fully fused per batch element (no qkv HBM round-trip).
# ---------------------------------------------------------------------------
def _attn_kernel(x_ref, g_ref, b_ref, wqkv_ref, bqkv_ref, wproj_ref, bproj_ref,
                 o_ref, qkv_scr, ctx_scr, *, num_heads):
    C = x_ref.shape[-1]
    hd = C // num_heads
    cd = qkv_scr.dtype

    # LayerNorm1 + fused QKV: ONE (N,C)@(C,3C) MXU matmul, lane-dense scratch
    # store (softmax scale was pre-folded into the q columns of Wqkv / bqkv).
    ln1 = _layernorm(x_ref[0], g_ref[...], b_ref[...])
    qkv = jnp.dot(ln1.astype(cd), wqkv_ref[...],
                  preferred_element_type=jnp.float32) + bqkv_ref[...]
    qkv_scr[...] = qkv.astype(cd)

    # Per-head attention from static lane slices of the (N,3C) scratch.  The
    # loop is a short fixed static unroll; each head's (N,N) scores die within
    # its iteration.
    # TODO(synk): at real shapes (hd=64) process 2 heads per slice (128-lane
    # dense) and flash-tile queries once N is padded to a multiple of 128.
    for h in range(num_heads):
        q = qkv_scr[:, h * hd:(h + 1) * hd]
        k = qkv_scr[:, C + h * hd:C + (h + 1) * hd]
        v = qkv_scr[:, 2 * C + h * hd:2 * C + (h + 1) * hd]
        # scores: contract the last dims directly (no explicit k.T).
        s = jax.lax.dot_general(q, k, (((1,), (1,)), ((), ())),
                                preferred_element_type=jnp.float32)   # (N, N)
        m = jnp.max(s, axis=-1, keepdims=True)
        p = jnp.exp(s - m)
        denom = jnp.sum(p, axis=-1, keepdims=True)
        ctx = jnp.dot(p.astype(cd), v, preferred_element_type=jnp.float32)
        # softmax denominator applied AFTER the PV matmul: (N,hd) multiply
        # instead of scaling the (N,N) attention matrix.
        ctx = ctx * pl.reciprocal(denom, approx=True)
        ctx_scr[:, h * hd:(h + 1) * hd] = ctx.astype(cd)

    # ONE full-K (K=C) output projection instead of num_heads thin K=hd matmuls.
    proj = jnp.dot(ctx_scr[...], wproj_ref[...],
                   preferred_element_type=jnp.float32) + bproj_ref[...]
    o_ref[0] = (x_ref[0] + proj).astype(o_ref.dtype)


def _attn_block(x, blk, *, num_heads, compute_dtype):
    B, N, C = x.shape
    cd = compute_dtype
    nbc = _const_nbuf()
    entries = [((1, N, C), x.dtype, 2), ((1, N, C), x.dtype, 2),      # x, out
               ((1, C), jnp.float32, 2 * nbc),                        # ln1 g/b
               ((C, 3 * C), cd, nbc), ((1, 3 * C), jnp.float32, nbc),  # Wqkv,bqkv
               ((C, C), cd, nbc), ((1, C), jnp.float32, nbc),          # Wproj,bproj
               ((N, 3 * C), cd, 1), ((N, C), cd, 1)]                   # scratch
    const = lambda b: (0, 0)
    return pl.pallas_call(
        functools.partial(_attn_kernel, num_heads=num_heads),
        out_shape=jax.ShapeDtypeStruct((B, N, C), x.dtype),
        grid_spec=pltpu.PrefetchScalarGridSpec(
            num_scalar_prefetch=0,
            grid=(B,),
            in_specs=[
                pl.BlockSpec((1, N, C), lambda b: (b, 0, 0)),
                _wspec((1, C), const),
                _wspec((1, C), const),
                _wspec((C, 3 * C), const),
                _wspec((1, 3 * C), const),
                _wspec((C, C), const),
                _wspec((1, C), const),
            ],
            out_specs=pl.BlockSpec((1, N, C), lambda b: (b, 0, 0)),
            scratch_shapes=[pltpu.VMEM((N, 3 * C), cd),     # fused qkv
                            pltpu.VMEM((N, C), cd)],        # concatenated ctx
        ),
        compiler_params=_cparams(("parallel",), entries),
    )(x, blk['ln1_g'], blk['ln1_b'], blk['w_qkv'], blk['b_qkv'],
      blk['w_proj'], blk['b_proj'])


# ---------------------------------------------------------------------------
# 2b) MLP kernel: LN2 + FC1 + GELU + FC2 + residual, tiled over token rows
#     ("parallel") and the hidden dim ("arbitrary" reduction with accumulator).
# ---------------------------------------------------------------------------
def _mlp_kernel(x_ref, g_ref, b_ref, w1_ref, b1_ref, w2_ref, b2_ref, o_ref,
                ln2x_scr, acc_scr):
    kh = pl.program_id(2)

    @pl.when(kh == 0)
    def _init():
        ln2x_scr[...] = _layernorm(x_ref[0], g_ref[...], b_ref[...]
                                   ).astype(ln2x_scr.dtype)
        acc_scr[...] = jnp.zeros_like(acc_scr)

    hid = jnp.dot(ln2x_scr[...], w1_ref[...],
                  preferred_element_type=jnp.float32) + b1_ref[...]
    hid = _gelu(hid)                                         # elementwise, f32
    acc_scr[...] += jnp.dot(hid.astype(w2_ref.dtype), w2_ref[...],
                            preferred_element_type=jnp.float32)

    @pl.when(kh == pl.num_programs(2) - 1)
    def _done():
        o_ref[0] = (x_ref[0] + acc_scr[...] + b2_ref[...]).astype(o_ref.dtype)


def _mlp_block(x, blk, *, compute_dtype):
    B, N, C = x.shape
    hidden = blk['w_fc1'].shape[1]
    tn = _row_tile(N)
    th = _hidden_tile(hidden)
    cd = compute_dtype
    nbc = _const_nbuf()
    entries = [((1, tn, C), x.dtype, 2), ((1, tn, C), x.dtype, 2),     # x, out
               ((1, C), jnp.float32, 2 * nbc),                         # ln2 g/b
               ((C, th), cd, 2), ((1, th), jnp.float32, 2),            # Wfc1,b1
               ((th, C), cd, 2), ((1, C), jnp.float32, nbc),           # Wfc2,b2
               ((tn, C), cd, 1), ((tn, C), jnp.float32, 1)]            # scratch
    return pl.pallas_call(
        _mlp_kernel,
        out_shape=jax.ShapeDtypeStruct((B, N, C), x.dtype),
        grid_spec=pltpu.PrefetchScalarGridSpec(
            num_scalar_prefetch=0,
            grid=(B, N // tn, hidden // th),
            in_specs=[
                pl.BlockSpec((1, tn, C), lambda b, i, k: (b, i, 0)),
                _wspec((1, C), lambda b, i, k: (0, 0)),
                _wspec((1, C), lambda b, i, k: (0, 0)),
                pl.BlockSpec((C, th), lambda b, i, k: (0, k)),   # pipelined over k
                pl.BlockSpec((1, th), lambda b, i, k: (0, k)),
                pl.BlockSpec((th, C), lambda b, i, k: (k, 0)),   # pipelined over k
                _wspec((1, C), lambda b, i, k: (0, 0)),
            ],
            out_specs=pl.BlockSpec((1, tn, C), lambda b, i, k: (b, i, 0)),
            scratch_shapes=[pltpu.VMEM((tn, C), cd),             # ln2(x) tile
                            pltpu.VMEM((tn, C), jnp.float32)],   # fc2 accumulator
        ),
        compiler_params=_cparams(("parallel", "parallel", "arbitrary"), entries),
    )(x, blk['ln2_g'], blk['ln2_b'], blk['w_fc1'], blk['b_fc1'],
      blk['w_fc2'], blk['b_fc2'])


# ---------------------------------------------------------------------------
# 3) Final LayerNorm + classification head on the cls token.
# ---------------------------------------------------------------------------
def _final_kernel(x_ref, g_ref, b_ref, wh_ref, bh_ref, xn_ref, logits_ref):
    xn = _layernorm(x_ref[0], g_ref[...], b_ref[...])
    xn_ref[0] = xn.astype(xn_ref.dtype)
    cls = xn[0:1, :].astype(wh_ref.dtype)                    # pre_logits = Identity
    logits = jnp.dot(cls, wh_ref[...],
                     preferred_element_type=jnp.float32) + bh_ref[...]
    logits_ref[0] = logits.astype(logits_ref.dtype)


def _final_norm_head(x, params):
    B, N, C = x.shape
    ncls = params['w_head'].shape[1]
    nbc = _const_nbuf()
    entries = [((1, N, C), x.dtype, 2), ((1, C), jnp.float32, 2 * nbc),
               ((C, ncls), params['w_head'].dtype, nbc),
               ((1, ncls), jnp.float32, nbc),
               ((1, N, C), x.dtype, 2), ((1, 1, ncls), jnp.float32, 2)]
    const = lambda b: (0, 0)
    return pl.pallas_call(
        _final_kernel,
        out_shape=(jax.ShapeDtypeStruct((B, N, C), x.dtype),
                   jax.ShapeDtypeStruct((B, 1, ncls), jnp.float32)),
        grid_spec=pltpu.PrefetchScalarGridSpec(
            num_scalar_prefetch=0,
            grid=(B,),
            in_specs=[
                pl.BlockSpec((1, N, C), lambda b: (b, 0, 0)),
                _wspec((1, C), const),
                _wspec((1, C), const),
                _wspec((C, ncls), const),
                _wspec((1, ncls), const),
            ],
            out_specs=(pl.BlockSpec((1, N, C), lambda b: (b, 0, 0)),
                       pl.BlockSpec((1, 1, ncls), lambda b: (b, 0, 0))),
        ),
        compiler_params=_cparams(("parallel",), entries),
    )(x, params['ln_g'], params['ln_b'], params['w_head'], params['b_head'])


# ---------------------------------------------------------------------------
# One-time parameter preparation (outside the per-forward path):
# fold the attention scale into the q columns of Wqkv/bqkv, cast all matmul
# weights to the compute dtype (bf16 default - bf16-native MXU on v5e/v6e/v7x;
# the residual stream, LN stats and softmax stay in f32).
# ---------------------------------------------------------------------------
def prepare_params(params, *, num_heads, compute_dtype=jnp.bfloat16):
    C = params['w_patch'].shape[1]
    hd = C // num_heads
    scale = hd ** (-0.5)
    prep = {
        'compute_dtype': compute_dtype,
        'num_heads': num_heads,
        'w_patch': params['w_patch'].astype(compute_dtype),
        'b_patch': params['b_patch'],
        'cls_token': params['cls_token'],
        'pos_embed': params['pos_embed'],
        'ln_g': params['ln_g'],
        'ln_b': params['ln_b'],
        'w_head': params['w_head'].astype(compute_dtype),
        'b_head': params['b_head'],
        'blocks': [],
    }
    for blk in params['blocks']:
        prep['blocks'].append(dict(
            ln1_g=blk['ln1_g'], ln1_b=blk['ln1_b'],
            w_qkv=blk['w_qkv'].at[:, :C].multiply(scale).astype(compute_dtype),
            b_qkv=blk['b_qkv'].at[:, :C].multiply(scale),
            w_proj=blk['w_proj'].astype(compute_dtype),
            b_proj=blk['b_proj'],
            ln2_g=blk['ln2_g'], ln2_b=blk['ln2_b'],
            w_fc1=blk['w_fc1'].astype(compute_dtype),
            b_fc1=blk['b_fc1'],
            w_fc2=blk['w_fc2'].astype(compute_dtype),
            b_fc2=blk['b_fc2'],
        ))
    return prep


# ---------------------------------------------------------------------------
# Full forward (Pallas path)
# ---------------------------------------------------------------------------
def vit_forward_pallas(x_img, prep, *, patch_size):
    """Returns (normed_tokens (B,N,C), logits (B,num_classes)), matching the
    PyTorch module with cls_only=False in eval mode."""
    B = x_img.shape[0]
    C = prep['w_patch'].shape[1]
    num_heads = prep['num_heads']
    cd = prep['compute_dtype']

    patches = _patchify(x_img, patch_size)                          # plumbing
    tok = _patch_embed(patches, prep['w_patch'], prep['b_patch'])   # (B, P, C)

    cls = jnp.broadcast_to(prep['cls_token'], (B, 1, C))
    tok = jnp.concatenate([cls, tok], axis=1) + prep['pos_embed']   # (B, N, C)

    for blk in prep['blocks']:
        tok = _attn_block(tok, blk, num_heads=num_heads, compute_dtype=cd)
        tok = _mlp_block(tok, blk, compute_dtype=cd)

    xn, logits = _final_norm_head(tok, prep)
    return xn, logits[:, 0, :]


# ---------------------------------------------------------------------------
# Pure-JAX reference mirroring the PyTorch module (f32, exact division softmax)
# ---------------------------------------------------------------------------
def _attention_ref(x, blk, num_heads):
    B, N, C = x.shape
    hd = C // num_heads
    scale = hd ** (-0.5)
    qkv = x @ blk['w_qkv'] + blk['b_qkv']
    qkv = qkv.reshape(B, N, 3, num_heads, hd).transpose(2, 0, 3, 1, 4)
    q, k, v = qkv[0], qkv[1], qkv[2]
    attn = jnp.einsum('bhnd,bhmd->bhnm', q, k) * scale
    attn = jax.nn.softmax(attn, axis=-1)
    out = jnp.einsum('bhnm,bhmd->bhnd', attn, v)
    out = out.transpose(0, 2, 1, 3).reshape(B, N, C)
    return out @ blk['w_proj'] + blk['b_proj']


def _block_ref(x, blk, num_heads):
    x = x + _attention_ref(_layernorm(x, blk['ln1_g'], blk['ln1_b']), blk, num_heads)
    h = _layernorm(x, blk['ln2_g'], blk['ln2_b'])
    h = _gelu(h @ blk['w_fc1'] + blk['b_fc1']) @ blk['w_fc2'] + blk['b_fc2']
    return x + h


def vit_forward_ref(x_img, params, *, patch_size, num_heads):
    B = x_img.shape[0]
    tok = _patchify(x_img, patch_size) @ params['w_patch'] + params['b_patch']
    C = params['w_patch'].shape[1]
    cls = jnp.broadcast_to(params['cls_token'], (B, 1, C))
    tok = jnp.concatenate([cls, tok], axis=1) + params['pos_embed']
    for blk in params['blocks']:
        tok = _block_ref(tok, blk, num_heads)
    xn = _layernorm(tok, params['ln_g'], params['ln_b'])
    logits = xn[:, 0, :] @ params['w_head'] + params['b_head']
    return xn, logits


# ---------------------------------------------------------------------------
# Deterministic parameter construction (Linear weights stored transposed so
# y = x @ W + b; w_patch corresponds to conv_weight.reshape(E, -1).T).
# ---------------------------------------------------------------------------
def _init_params(key, *, img, patch, in_chans, C, depth, num_heads,
                 mlp_ratio, num_classes):
    num_patches = (img // patch) ** 2
    N = num_patches + 1
    K = in_chans * patch * patch
    hidden = int(C * mlp_ratio)

    def nrm(k, shape, std):
        return jax.random.normal(k, shape, jnp.float32) * std

    keys = iter(jax.random.split(key, 8 + 12 * depth))
    params = dict(
        w_patch=nrm(next(keys), (K, C), 0.02),
        b_patch=nrm(next(keys), (1, C), 0.02),
        cls_token=nrm(next(keys), (1, 1, C), 0.02),
        pos_embed=nrm(next(keys), (1, N, C), 0.02),
        ln_g=1.0 + nrm(next(keys), (1, C), 0.1),
        ln_b=nrm(next(keys), (1, C), 0.05),
        w_head=nrm(next(keys), (C, num_classes), 0.02),
        b_head=nrm(next(keys), (1, num_classes), 0.02),
        blocks=[],
    )
    for _ in range(depth):
        params['blocks'].append(dict(
            ln1_g=1.0 + nrm(next(keys), (1, C), 0.1),
            ln1_b=nrm(next(keys), (1, C), 0.05),
            w_qkv=nrm(next(keys), (C, 3 * C), 0.02),
            b_qkv=nrm(next(keys), (1, 3 * C), 0.02),      # qkv_bias=True
            w_proj=nrm(next(keys), (C, C), 0.02),
            b_proj=nrm(next(keys), (1, C), 0.02),
            ln2_g=1.0 + nrm(next(keys), (1, C), 0.1),
            ln2_b=nrm(next(keys), (1, C), 0.05),
            w_fc1=nrm(next(keys), (C, hidden), 0.02),
            b_fc1=nrm(next(keys), (1, hidden), 0.02),
            w_fc2=nrm(next(keys), (hidden, C), 0.02),
            b_fc2=nrm(next(keys), (1, C), 0.02),
        ))
    return params


if __name__ == "__main__":
    # Small but structurally faithful configuration:
    #   B=2 images of 3x32x32, patch 8 -> 16 patches + 1 cls = 17 tokens,
    #   embed_dim=64, depth=2, heads=4 (head_dim=16), mlp_ratio=4, 10 classes.
    B, img, patch, in_chans = 2, 32, 8, 3
    C, depth, num_heads, mlp_ratio, num_classes = 64, 2, 4, 4.0, 10

    key = jax.random.PRNGKey(0)
    kp, kx = jax.random.split(key)
    params = _init_params(kp, img=img, patch=patch, in_chans=in_chans, C=C,
                          depth=depth, num_heads=num_heads,
                          mlp_ratio=mlp_ratio, num_classes=num_classes)
    x_img = jax.random.normal(kx, (B, in_chans, img, img), jnp.float32)

    xn_ref, logits_ref = vit_forward_ref(x_img, params, patch_size=patch,
                                         num_heads=num_heads)

    def _run(prep):
        xn, lg = vit_forward_pallas(x_img, prep, patch_size=patch)
        return jax.block_until_ready(xn), jax.block_until_ready(lg)

    # ---- f32 matmul operands (validation build) ---------------------------
    prep32 = prepare_params(params, num_heads=num_heads,
                            compute_dtype=jnp.float32)
    try:
        xn, logits = _run(prep32)
    except Exception:
        # Graceful fallback: this JAX build rejected pl.Buffered(1) single
        # buffering of grid-constant weights -> use default double buffering.
        _Cfg.single_buffer_weights = False
        xn, logits = _run(prep32)

    assert xn.shape == xn_ref.shape and logits.shape == logits_ref.shape
    # Tolerance 2e-3 absorbs pl.reciprocal(approx=True) in the softmax.
    assert jnp.allclose(xn, xn_ref, atol=2e-3, rtol=2e-3), (
        f"tokens max abs err {jnp.max(jnp.abs(xn - xn_ref))}")
    assert jnp.allclose(logits, logits_ref, atol=2e-3, rtol=2e-3), (
        f"logits max abs err {jnp.max(jnp.abs(logits - logits_ref))}")

    # ---- bf16 matmul operands, f32 accumulation (default fast path) -------
    prep16 = prepare_params(params, num_heads=num_heads)   # bf16 default
    xn16, logits16 = _run(prep16)
    assert jnp.allclose(xn16, xn_ref, atol=1e-1, rtol=1e-1), (
        f"bf16 tokens max abs err {jnp.max(jnp.abs(xn16 - xn_ref))}")
    assert jnp.allclose(logits16, logits_ref, atol=1e-1, rtol=1e-1), (
        f"bf16 logits max abs err {jnp.max(jnp.abs(logits16 - logits_ref))}")

    print("KERNEL_OK")
</pallas_src>

<mosaic_0001>
module attributes {stable_mosaic.version = 11 : i64} {
  func.func @_patch_embed_kernel(%arg0: i32, %arg1: i32, %arg2: memref<1x16x192xf32, #tpu.memory_space<vmem>>, %arg3: memref<192x64xf32, #tpu.memory_space<vmem>>, %arg4: memref<1x64xf32, #tpu.memory_space<vmem>>, %arg5: memref<1x16x64xf32, #tpu.memory_space<vmem>>) attributes {dimension_semantics = [#tpu.dimension_semantics<parallel>, #tpu.dimension_semantics<parallel>], iteration_bounds = array<i64: 2, 1>, scalar_prefetch = 0 : i64, scratch_operands = 0 : i64, tpu.core_type = #tpu.core_type<tc>, window_params = [{transform_indices = @transform_0, window_bounds = array<i64: 1, 16, 192>}, {pipeline_mode = #tpu.pipeline_mode<synchronous>, transform_indices = @transform_1, window_bounds = array<i64: 192, 64>}, {pipeline_mode = #tpu.pipeline_mode<synchronous>, transform_indices = @transform_2, window_bounds = array<i64: 1, 64>}, {transform_indices = @transform_3, window_bounds = array<i64: 1, 16, 64>}]} {
    %c0 = arith.constant 0 : index
    %c0_0 = arith.constant 0 : index
    %c0_1 = arith.constant 0 : index
    %0 = vector.load %arg2[%c0, %c0_0, %c0_1] : memref<1x16x192xf32, #tpu.memory_space<vmem>>, vector<1x16x192xf32>
    %1 = vector.shape_cast %0 : vector<1x16x192xf32> to vector<16x192xf32>
    %c0_2 = arith.constant 0 : index
    %c0_3 = arith.constant 0 : index
    %2 = vector.load %arg3[%c0_2, %c0_3] : memref<192x64xf32, #tpu.memory_space<vmem>>, vector<192x64xf32>
    %cst = arith.constant dense<0.000000e+00> : vector<16x64xf32>
    %3 = tpu.matmul %1, %2, %cst {dimension_numbers = #tpu.dot_dimension_numbers<[1], [0], [0], [1], [0, 0, 1, 1], [], []>} : vector<16x192xf32>, vector<192x64xf32>, vector<16x64xf32> -> vector<16x64xf32>
    %c0_4 = arith.constant 0 : index
    %c0_5 = arith.constant 0 : index
    %4 = vector.load %arg4[%c0_4, %c0_5] : memref<1x64xf32, #tpu.memory_space<vmem>>, vector<1x64xf32>
    %5 = vector.broadcast %4 : vector<1x64xf32> to vector<16x64xf32>
    %6 = arith.addf %3, %5 : vector<16x64xf32>
    %c0_6 = arith.constant 0 : index
    %c0_7 = arith.constant 0 : index
    %c0_8 = arith.constant 0 : index
    %7 = vector.load %arg5[%c0_6, %c0_7, %c0_8] : memref<1x16x64xf32, #tpu.memory_space<vmem>>, vector<1x16x64xf32>
    %8 = vector.shape_cast %7 : vector<1x16x64xf32> to vector<16x64xf32>
    %9 = vector.shape_cast %6 : vector<16x64xf32> to vector<1x16x64xf32>
    tpu.vector_store %arg5[%c0_6, %c0_7, %c0_8], %9 {strides = array<i32>} : memref<1x16x64xf32, #tpu.memory_space<vmem>>, vector<1x16x64xf32>,
    return
  }
  func.func @transform_0(%arg0: i32, %arg1: i32) -> (i32, i32, i32) {
    %c0_i32 = arith.constant 0 : i32
    %c0_i32_0 = arith.constant 0 : i32
    return %arg0, %arg1, %c0_i32 : i32, i32, i32
  }
  func.func @transform_1(%arg0: i32, %arg1: i32) -> (i32, i32) {
    %c0_i32 = arith.constant 0 : i32
    %c0_i32_0 = arith.constant 0 : i32
    %c0_i32_1 = arith.constant 0 : i32
    return %c0_i32, %c0_i32_0 : i32, i32
  }
  func.func @transform_2(%arg0: i32, %arg1: i32) -> (i32, i32) {
    %c0_i32 = arith.constant 0 : i32
    %c0_i32_0 = arith.constant 0 : i32
    %c0_i32_1 = arith.constant 0 : i32
    return %c0_i32, %c0_i32_0 : i32, i32
  }
  func.func @transform_3(%arg0: i32, %arg1: i32) -> (i32, i32, i32) {
    %c0_i32 = arith.constant 0 : i32
    %c0_i32_0 = arith.constant 0 : i32
    return %arg0, %arg1, %c0_i32 : i32, i32, i32
  }
}

module attributes {stable_mosaic.version = 11 : i64} {
  func.func @_patch_embed_kernel(%arg0: i32, %arg1: i32, %arg2: memref<1x16x192xf32, #tpu.memory_space<vmem>>, %arg3: memref<192x64xf32, #tpu.memory_space<vmem>>, %arg4: memref<1x64xf32, #tpu.memory_space<vmem>>, %arg5: memref<1x16x64xf32, #tpu.memory_space<vmem>>) attributes {dimension_semantics = [#tpu.dimension_semantics<parallel>, #tpu.dimension_semantics<parallel>], iteration_bounds = array<i64: 2, 1>, scalar_prefetch = 0 : i64, scratch_operands = 0 : i64, tpu.core_type = #tpu.core_type<tc>, window_params = [{transform_indices = @transform_0, window_bounds = array<i64: 1, 16, 192>}, {pipeline_mode = #tpu.pipeline_mode<synchronous>, transform_indices = @transform_1, window_bounds = array<i64: 192, 64>}, {pipeline_mode = #tpu.pipeline_mode<synchronous>, transform_indices = @transform_2, window_bounds = array<i64: 1, 64>}, {transform_indices = @transform_3, window_bounds = array<i64: 1, 16, 64>}]} {
    %c0 = arith.constant 0 : index
    %c0_0 = arith.constant 0 : index
    %c0_1 = arith.constant 0 : index
    %0 = vector.load %arg2[%c0, %c0_0, %c0_1] : memref<1x16x192xf32, #tpu.memory_space<vmem>>, vector<1x16x192xf32>
    %1 = vector.shape_cast %0 : vector<1x16x192xf32> to vector<16x192xf32>
    %c0_2 = arith.constant 0 : index
    %c0_3 = arith.constant 0 : index
    %2 = vector.load %arg3[%c0_2, %c0_3] : memref<192x64xf32, #tpu.memory_space<vmem>>, vector<192x64xf32>
    %cst = arith.constant dense<0.000000e+00> : vector<16x64xf32>
    %3 = tpu.matmul %1, %2, %cst {dimension_numbers = #tpu.dot_dimension_numbers<[1], [0], [0], [1], [0, 0, 1, 1], [], []>} : vector<16x192xf32>, vector<192x64xf32>, vector<16x64xf32> -> vector<16x64xf32>
    %c0_4 = arith.constant 0 : index
    %c0_5 = arith.constant 0 : index
    %4 = vector.load %arg4[%c0_4, %c0_5] : memref<1x64xf32, #tpu.memory_space<vmem>>, vector<1x64xf32>
    %5 = vector.broadcast %4 : vector<1x64xf32> to vector<16x64xf32>
    %6 = arith.addf %3, %5 : vector<16x64xf32>
    %c0_6 = arith.constant 0 : index
    %c0_7 = arith.constant 0 : index
    %c0_8 = arith.constant 0 : index
    %7 = vector.load %arg5[%c0_6, %c0_7, %c0_8] : memref<1x16x64xf32, #tpu.memory_space<vmem>>, vector<1x16x64xf32>
    %8 = vector.shape_cast %7 : vector<1x16x64xf32> to vector<16x64xf32>
    %9 = vector.shape_cast %6 : vector<16x64xf32> to vector<1x16x64xf32>
    tpu.vector_store %arg5[%c0_6, %c0_7, %c0_8], %9 {strides = array<i32>} : memref<1x16x64xf32, #tpu.memory_space<vmem>>, vector<1x16x64xf32>,
    return
  }
  func.func @transform_0(%arg0: i32, %arg1: i32) -> (i32, i32, i32) {
    %c0_i32 = arith.constant 0 : i32
    %c0_i32_0 = arith.constant 0 : i32
    return %arg0, %arg1, %c0_i32 : i32, i32, i32
  }
  func.func @transform_1(%arg0: i32, %arg1: i32) -> (i32, i32) {
    %c0_i32 = arith.constant 0 : i32
    %c0_i32_0 = arith.constant 0 : i32
    %c0_i32_1 = arith.constant 0 : i32
    return %c0_i32, %c0_i32_0 : i32, i32
  }
  func.func @transform_2(%arg0: i32, %arg1: i32) -> (i32, i32) {
    %c0_i32 = arith.constant 0 : i32
    %c0_i32_0 = arith.constant 0 : i32
    %c0_i32_1 = arith.constant 0 : i32
    return %c0_i32, %c0_i32_0 : i32, i32
  }
  func.func @transform_3(%arg0: i32, %arg1: i32) -> (i32, i32, i32) {
    %c0_i32 = arith.constant 0 : i32
    %c0_i32_0 = arith.constant 0 : i32
    return %arg0, %arg1, %c0_i32 : i32, i32, i32
  }
}

</mosaic_0001>

<llo_original>
// kernel: tpu_custom_call.1
$region0: #{tpu_custom_call.1}
  #allocation0 [shape = 'u32[]', space=smem, size = 0x4, offset = 0x4, fixed_abs, tag = 'smem constant byte address 0x4 - core index']
  #allocation1 [shape = 'u32[144,128]{1,0:T(1,128)}', space=vmem, size = 0x12000, scoped, tag = 'internal scratch']
  %s0 = inlined_call_operand.vmem [shape: f32[2,16,192], index: 0, kind: input, shape index: {}]
  %s1 = inlined_call_operand.vmem [shape: f32[192,64], index: 1, kind: input, shape index: {}]
  %s2 = inlined_call_operand.vmem [shape: f32[1,64], index: 2, kind: input, shape index: {}]
  %s3 = inlined_call_operand.hbm [shape: f32[2,16,64], index: 3, kind: output, shape index: {}]
  %s4 = sld [smem:[#allocation0]]
  $region45: #{tpu_custom_call.1} parent=0
    _
  %s6 = ssub.s32 1, %s4
  %s7 = scalar_select 0, %s6, %s4
  $region1: #{tpu_custom_call.1} parent=0
    #allocation2 [shape = 'u8[16384]{0}', space=vmem, size = 0x4000, scoped, tag = 'output window, operand 0']
    #allocation3 [shape = 's32[2]{0}', space=sflag, size = 0x8, scoped, tag = 'scoped memory for tpu_custom_call.1']
    %8 = vsyncpa [#allocation3], 0
    %s9 = scalar_lea.sflag [#allocation3], 1
    %10 = vsyncpa %s9, 0
    loop: start=0, step=1, limit=4
    $region2: #{tpu_custom_call.1} parent=1 // loop_pre_header
      _
    $region3: #{tpu_custom_call.1} parent=1 // loop_header
      %s12 = sphi 0, %s16
      %p13 = scmp.ge.s32.totalorder %s12, 4
      %s19 = sphi 0, %s31
      %s20 = sphi 0, %s27
      %s21 = sphi 0, %s19
      %s22 = sphi 0, %s20
      %s23 = sphi 0, %s21
      %s24 = sphi 0, %s22
      %s36 = sphi 0, %s38
      %s39 = sphi 0, %s36
      %s40 = sphi 0, %s39
      %s56 = sphi 0, %s40
      %s60 = sphi 0, %s60
      %s62 = sphi 0, %s60
      %s63 = sphi 0, %s62
      %s77 = sphi 0, %s63
      %s81 = sphi 0, %s81
      %s83 = sphi 0, %s81
      %s84 = sphi 0, %s83
      %s98 = sphi 0, %s84
      %s106 = sphi 0, %s108
      %s109 = sphi 0, %s106
      %s110 = sphi 0, %s109
      %s126 = sphi 0, %s110
    $region4: #{tpu_custom_call.1} parent=1 // loop_header_branch
      %15 = sbr.rel (%p13) target = $region8
    $region5: #{tpu_custom_call.1} parent=1 // loop_body
      %s17 = ssub.s32 %s12, 1
      %s18 = ssub.s32 %s12, 2
      %s25 = sadd.s32 1, %s20
      %p26 = scmp.ge.s32.totalorder %s25, 1
      %s27 = scalar_select %p26, 0, %s25
      %s28 = sadd.s32 1, %s19
      %s29 = scalar_select %p26, %s28, %s19
      %p30 = scmp.ge.s32.totalorder %s29, 2
      %s31 = scalar_select %p30, 0, %s29
      %s32 = ssub.s32 %s19, %s31
      %s33 = ssub.s32 %s20, %s27
      %s34 = sor.u32 %s32, %s33
      %p35 = scmp.eq.s32.totalorder %s34, 0
      %s37 = sadd.s32 %s36, 1
      %s38 = scalar_select %p35, %s36, %s37
      %p41 = pneg %p35
      %p42 = scmp.eq.s32.totalorder %s12, 1
      %p43 = por %p41, %p42
      %p44 = scmp.ne.s32.totalorder %s36, %s39
      %p45 = scmp.eq.s32.totalorder %s12, 0
      %p46 = por %p44, %p45
      %p47 = scmp.ne.s32.totalorder %s36, %s39
      %p48 = scmp.eq.s32.totalorder %s17, 1
      %p49 = por %p47, %p48
      %p50 = scmp.ne.s32.totalorder %s39, %s40
      %p51 = scmp.eq.s32.totalorder %s17, 0
      %p52 = por %p50, %p51
      %p53 = scmp.ne.s32.totalorder %s39, %s40
      %p54 = scmp.eq.s32.totalorder %s18, 1
      %p55 = por %p53, %p54
      %p57 = scmp.ne.s32.totalorder %s40, %s56
      %p58 = scmp.eq.s32.totalorder %s18, 0
      %p59 = por %p57, %p58
      %s61 = sadd.s32 %s60, 1
      %p64 = scmp.eq.s32.totalorder %s12, 1
      %p65 = scmp.ne.s32.totalorder %s60, %s62
      %p66 = scmp.eq.s32.totalorder %s12, 0
      %p67 = por %p65, %p66
      %p68 = scmp.ne.s32.totalorder %s60, %s62
      %p69 = scmp.eq.s32.totalorder %s17, 1
      %p70 = por %p68, %p69
      %p71 = scmp.ne.s32.totalorder %s62, %s63
      %p72 = scmp.eq.s32.totalorder %s17, 0
      %p73 = por %p71, %p72
      %p74 = scmp.ne.s32.totalorder %s62, %s63
      %p75 = scmp.eq.s32.totalorder %s18, 1
      %p76 = por %p74, %p75
      %p78 = scmp.ne.s32.totalorder %s63, %s77
      %p79 = scmp.eq.s32.totalorder %s18, 0
      %p80 = por %p78, %p79
      %s82 = sadd.s32 %s81, 1
      %p85 = scmp.eq.s32.totalorder %s12, 1
      %p86 = scmp.ne.s32.totalorder %s81, %s83
      %p87 = scmp.eq.s32.totalorder %s12, 0
      %p88 = por %p86, %p87
      %p89 = scmp.ne.s32.totalorder %s81, %s83
      %p90 = scmp.eq.s32.totalorder %s17, 1
      %p91 = por %p89, %p90
      %p92 = scmp.ne.s32.totalorder %s83, %s84
      %p93 = scmp.eq.s32.totalorder %s17, 0
      %p94 = por %p92, %p93
      %p95 = scmp.ne.s32.totalorder %s83, %s84
      %p96 = scmp.eq.s32.totalorder %s18, 1
      %p97 = por %p95, %p96
      %p99 = scmp.ne.s32.totalorder %s84, %s98
      %p100 = scmp.eq.s32.totalorder %s18, 0
      %p101 = por %p99, %p100
      %s102 = ssub.s32 %s19, %s31
      %s103 = ssub.s32 %s20, %s27
      %s104 = sor.u32 %s102, %s103
      %p105 = scmp.eq.s32.totalorder %s104, 0
      %s107 = sadd.s32 %s106, 1
      %s108 = scalar_select %p105, %s106, %s107
      %p111 = pneg %p105
      %p112 = scmp.eq.s32.totalorder %s12, 1
      %p113 = por %p111, %p112
      %p114 = scmp.ne.s32.totalorder %s106, %s109
      %p115 = scmp.eq.s32.totalorder %s12, 0
      %p116 = por %p114, %p115
      %p117 = scmp.ne.s32.totalorder %s106, %s109
      %p118 = scmp.eq.s32.totalorder %s17, 1
      %p119 = por %p117, %p118
      %p120 = scmp.ne.s32.totalorder %s109, %s110
      %p121 = scmp.eq.s32.totalorder %s17, 0
      %p122 = por %p120, %p121
      %p123 = scmp.ne.s32.totalorder %s109, %s110
      %p124 = scmp.eq.s32.totalorder %s18, 1
      %p125 = por %p123, %p124
      %p127 = scmp.ne.s32.totalorder %s110, %s126
      %p128 = scmp.eq.s32.totalorder %s18, 0
      %p129 = por %p127, %p128
      %p130 = scmp.le.s32.totalorder 1, %s12
      %p131 = scmp.lt.s32.totalorder %s12, 3
      %p132 = pnand %p130, %p131
      %p133 = pneg %p132
      // Predicated region
      $region9: #{tpu_custom_call.1} parent=5 // pred_check
        _
      $region10: #{tpu_custom_call.1} parent=5 // pred_check_branch
        %135 = sbr.rel (%p132) target = $region12
      $region11: #{tpu_custom_call.1} parent=5 // pred_region
        %s136 = ssub.s32 %s12, 1
        // Predicated region
        $region13: #{tpu_custom_call.1} parent=11 // pred_check
          %p137 = pneg %p73
        $region14: #{tpu_custom_call.1} parent=11 // pred_check_branch
          %139 = sbr.rel (%p137) target = $region16
        $region15: #{tpu_custom_call.1} parent=11 // pred_region
          _
        $region16: #{tpu_custom_call.1} parent=11 // pred_fallthru
          _
        // Predicated region
        $region17: #{tpu_custom_call.1} parent=11 // pred_check
          %p140 = pneg %p94
        $region18: #{tpu_custom_call.1} parent=11 // pred_check_branch
          %142 = sbr.rel (%p140) target = $region20
        $region19: #{tpu_custom_call.1} parent=11 // pred_region
          _
        $region20: #{tpu_custom_call.1} parent=11 // pred_fallthru
          _
      $region12: #{tpu_custom_call.1} parent=5 // pred_fallthru
        _
      %p143 = scmp.lt.s32.totalorder %s12, 2
      // Predicated region
      $region21: #{tpu_custom_call.1} parent=5 // pred_check
        %p144 = pneg %p143
      $region22: #{tpu_custom_call.1} parent=5 // pred_check_branch
        %146 = sbr.rel (%p144) target = $region24
      $region23: #{tpu_custom_call.1} parent=5 // pred_region
        // Predicated region
        $region25: #{tpu_custom_call.1} parent=23 // pred_check
          %p147 = pneg %p46
        $region26: #{tpu_custom_call.1} parent=23 // pred_check_branch
          %149 = sbr.rel (%p147) target = $region28
        $region27: #{tpu_custom_call.1} parent=23 // pred_region
          %s150 = smul.u32 2, %s20
          %p151 = scmp.lt.s32.totalorder %s19, 1
          %s152 = scalar_select %p151, %s19, 1
          %p153 = scmp.lt.s32.totalorder %s150, 1
          %s154 = scalar_select %p153, %s150, 1
          %s155 = smul.addr %s154, 2
          %s156 = smul.addr %s152, 4
          %s157 = sadd.s32 %s155, %s156
          %s158 = smul.addr %s157, 8
          %s159 = scalar_lea.vmem %s0, %s158
          %s160 = smul.u32 2, %s20
        $region28: #{tpu_custom_call.1} parent=23 // pred_fallthru
          _
      $region24: #{tpu_custom_call.1} parent=5 // pred_fallthru
        _
      %p161 = scmp.le.s32.totalorder 1, %s12
      %p162 = scmp.lt.s32.totalorder %s12, 3
      %p163 = pnand %p161, %p162
      %p164 = pneg %p163
      // Predicated region
      $region29: #{tpu_custom_call.1} parent=5 // pred_check
        _
      $region30: #{tpu_custom_call.1} parent=5 // pred_check_branch
        %166 = sbr.rel (%p163) target = $region32
      $region31: #{tpu_custom_call.1} parent=5 // pred_region
        %s167 = ssub.s32 %s12, 1
        %s168 = smul.u32 2, %s22
        %p169 = scmp.lt.s32.totalorder %s21, 1
        %s170 = scalar_select %p169, %s21, 1
        %p171 = scmp.lt.s32.totalorder %s168, 1
        %s172 = scalar_select %p171, %s168, 1
        %s173 = smul.addr %s172, 2
        %s174 = smul.addr %s170, 4
        %s175 = sadd.s32 %s173, %s174
        %s176 = smul.addr %s175, 8
        %s177 = scalar_lea.vmem %s0, %s176
        %p178 = pneg %p52
        %p179 = pneg %p49
        %p180 = pneg %p73
        %p181 = pneg %p70
        %p182 = pneg %p94
        %p183 = pneg %p91
        %p184 = pneg %p122
        %p185 = pneg %p119
        %s186 = sand.u32 %s109, 1
        %s187 = scalar_lea.sflag [#allocation3], %s186
        %s188 = sand.u32 %s109, 1
        %s189 = smul.addr %s188, 16
        %s190 = scalar_lea.vmem [#allocation2], %s189
        %s191 = smul.u32 2, %s22
        %p192 = scmp.lt.s32.totalorder %s21, 1
        %s193 = scalar_select %p192, %s21, 1
        %p194 = scmp.lt.s32.totalorder %s191, 1
        %s195 = scalar_select %p194, %s191, 1
        %s196 = smul.addr %s195, 2
        %s197 = smul.addr %s193, 4
        %s198 = sadd.s32 %s196, %s197
        %s199 = smul.addr %s198, 8
        %s200 = scalar_lea.vmem %s0, %s199
        %s201 = smul.u32 2, %s22
        %s202 = smul.u32 2, %s22
        %v203 = vld [vmem:[%s200] sm:$0xff]
        %v204 = vld [vmem:[%s200 + $0x8] sm:$0xff]
        %v205 = vld [vmem:[%s200 + $0x10] sm:$0xff]
        %v206 = vld [vmem:[%s200 + $0x18] sm:$0xff]
        %v207 = vld [vmem:[%s1] sm:$0xff]
        %v208 = vld [vmem:[%s1 + $0x8] sm:$0xff]
        %v209 = vld [vmem:[%s1 + $0x10] sm:$0xff]
        %v210 = vld [vmem:[%s1 + $0x18] sm:$0xff]
        %v211 = vld [vmem:[%s1 + $0x20] sm:$0xff]
        %v212 = vld [vmem:[%s1 + $0x28] sm:$0xff]
        %v213 = vld [vmem:[%s1 + $0x30] sm:$0xff]
        %v214 = vld [vmem:[%s1 + $0x38] sm:$0xff]
        %v215 = vld [vmem:[%s1 + $0x40] sm:$0xff]
        %v216 = vld [vmem:[%s1 + $0x48] sm:$0xff]
        %v217 = vld [vmem:[%s1 + $0x50] sm:$0xff]
        %v218 = vld [vmem:[%s1 + $0x58] sm:$0xff]
        %v219 = vld [vmem:[%s1 + $0x60] sm:$0xff]
        %v220 = vld [vmem:[%s1 + $0x68] sm:$0xff]
        %v221 = vld [vmem:[%s1 + $0x70] sm:$0xff]
        %v222 = vld [vmem:[%s1 + $0x78] sm:$0xff]
        %v223 = vld [vmem:[%s1 + $0x80] sm:$0xff]
        %v224 = vld [vmem:[%s1 + $0x88] sm:$0xff]
        %v225 = vld [vmem:[%s1 + $0x90] sm:$0xff]
        %v226 = vld [vmem:[%s1 + $0x98] sm:$0xff]
        %v227 = vld [vmem:[%s1 + $0xa0] sm:$0xff]
        %v228 = vld [vmem:[%s1 + $0xa8] sm:$0xff]
        %v229 = vld [vmem:[%s1 + $0xb0] sm:$0xff]
        %v230 = vld [vmem:[%s1 + $0xb8] sm:$0xff]
        %v231 = vld [vmem:[%s2] sm:$0x1]
        %v233 = vlaneseq
        %v234 = vshrl.u32 %v233, 7
        %v235 = vsub.s32 0, %v234
        %v236 = vrot.slane %v231, %v235
        %vm238 = vcmask 523264
        %v240 = vsel %vm238, %v204, 0
        %v243 = vsel %vm238, %v206, 0
        %245 = vmatprep.subr.mxu0 0.0
        %246 = vmatpush1.msra.mxu0 %v222
        %247 = vmatprep.subr.mxu0 0.0
        %248 = vmatpush1.msra.mxu0 %v221
        %249 = vmatprep.subr.mxu0 0.0
        %250 = vmatpush1.msra.mxu0 %v220
        %251 = vmatprep.subr.mxu0 0.0
        %252 = vmatpush1.msra.mxu0 %v219
        %253 = vmatprep.subr.mxu0 0.0
        %254 = vmatpush1.msra.mxu0 %v218
        %255 = vmatprep.subr.mxu0 0.0
        %256 = vmatpush1.msra.mxu0 %v217
        %257 = vmatprep.subr.mxu0 0.0
        %258 = vmatpush1.msra.mxu0 %v216
        %259 = vmatprep.subr.mxu0 0.0
        %260 = vmatpush1.msra.mxu0 %v215
        %261 = vmatprep.subr.mxu0 0.0
        %262 = vmatpush1.msra.mxu0 %v214
        %263 = vmatprep.subr.mxu0 0.0
        %264 = vmatpush1.msra.mxu0 %v213
        %265 = vmatprep.subr.mxu0 0.0
        %266 = vmatpush1.msra.mxu0 %v212
        %267 = vmatprep.subr.mxu0 0.0
        %268 = vmatpush1.msra.mxu0 %v211
        %269 = vmatprep.subr.mxu0 0.0
        %270 = vmatpush1.msra.mxu0 %v210
        %271 = vmatprep.subr.mxu0 0.0
        %272 = vmatpush1.msra.mxu0 %v209
        %273 = vmatprep.subr.mxu0 0.0
        %274 = vmatpush1.msra.mxu0 %v208
        %275 = vmatprep.subr.mxu0 0.0
        %276 = vmatpush1.msra.mxu0 %v207
        %277 = vmatprep.subr.mxu0 0.0
        %278 = vmatpush2.msra.mxu0 0.0
        %279 = vmatprep.subr.mxu0 0.0
        %280 = vmatpush2.msra.mxu0 0.0
        %281 = vmatprep.subr.mxu0 0.0
        %282 = vmatpush2.msra.mxu0 0.0
        %283 = vmatprep.subr.mxu0 0.0
        %284 = vmatpush2.msra.mxu0 0.0
        %285 = vmatprep.subr.mxu0 0.0
        %286 = vmatpush2.msra.mxu0 0.0
        %287 = vmatprep.subr.mxu0 0.0
        %288 = vmatpush2.msra.mxu0 0.0
        %289 = vmatprep.subr.mxu0 0.0
        %290 = vmatpush2.msra.mxu0 0.0
        %291 = vmatprep.subr.mxu0 0.0
        %292 = vmatpush2.msra.mxu0 0.0
        %293 = vmatprep.subr.mxu0 0.0
        %294 = vmatpush2.msra.mxu0 %v230
        %295 = vmatprep.subr.mxu0 0.0
        %296 = vmatpush2.msra.mxu0 %v229
        %297 = vmatprep.subr.mxu0 0.0
        %298 = vmatpush2.msra.mxu0 %v228
        %299 = vmatprep.subr.mxu0 0.0
        %300 = vmatpush2.msra.mxu0 %v227
        %301 = vmatprep.subr.mxu0 0.0
        %302 = vmatpush2.msra.mxu0 %v226
        %303 = vmatprep.subr.mxu0 0.0
        %304 = vmatpush2.msra.mxu0 %v225
        %305 = vmatprep.subr.mxu0 0.0
        %306 = vmatpush2.msra.mxu0 %v224
        %307 = vmatprep.subr.mxu0 0.0
        %308 = vmatpush2.msra.mxu0 %v223
        %309 = vmatprep.mubr.f32.mxu0 %v240
        %310 = vmatmul.mubr.f32.gmra.mxu0 %v203
        %v311 = vpop.f32.mrf.mxu0
        %v312 = vadd.f32 %v236, %v311
        %v313 = vpop.f32.mrf.mxu0
        %314 = vmatprep.mubr.f32.mxu0 %v243
        %315 = vmatmul.mubr.f32.gmra.mxu0 %v205
        %v316 = vpop.f32.mrf.mxu0
        %v317 = vadd.f32 %v236, %v316
        %v318 = vpop.f32.mrf.mxu0
        %319 = vdwg.mxu0
        %320 = vst.msk [vmem:[%s190] sm:$0xff] %vm238, %v312
        %321 = vst.msk [vmem:[%s190 + $0x8] sm:$0xff] %vm238, %v317
        %s322 = sand.u32 %s109, 1
        %s323 = scalar_lea.sflag [#allocation3], %s322
        %s324 = sand.u32 %s109, 1
        %s325 = smul.addr %s324, 16
        %s326 = scalar_lea.vmem [#allocation2], %s325
        // Predicated region
        $region33: #{tpu_custom_call.1} parent=31 // pred_check
          %p327 = pneg %p119
        $region34: #{tpu_custom_call.1} parent=31 // pred_check_branch
          %329 = sbr.rel (%p327) target = $region36
        $region35: #{tpu_custom_call.1} parent=31 // pred_region
          %s330 = smul.u32 2, %s22
          %s332 = ssub.s32 256, 256
          %333 = vsyncadd %s323, %s332
          %s334 = smul.addr %s21, 2
          %s335 = sadd.s32 %s330, %s334
          %s336 = smul.addr %s335, 128
          %s337 = scalar_lea.hbm %s3, %s336
          %s338 = sshll.u32 %s326, 4
          %s339 = int_to_ptr.vmem [resolvable:$true] %s338
          %344 = dma.vmem_to_hbm [thread:$0]  %s339, 256, %s337, %s323, 128, 128, 8
        $region36: #{tpu_custom_call.1} parent=31 // pred_fallthru
          _
      $region32: #{tpu_custom_call.1} parent=5 // pred_fallthru
        _
      %p345 = scmp.le.s32.totalorder 2, %s12
      // Predicated region
      $region37: #{tpu_custom_call.1} parent=5 // pred_check
        %p346 = pneg %p345
      $region38: #{tpu_custom_call.1} parent=5 // pred_check_branch
        %348 = sbr.rel (%p346) target = $region40
      $region39: #{tpu_custom_call.1} parent=5 // pred_region
        %s349 = ssub.s32 %s12, 2
        // Predicated region
        $region41: #{tpu_custom_call.1} parent=39 // pred_check
          %p350 = pneg %p125
        $region42: #{tpu_custom_call.1} parent=39 // pred_check_branch
          %352 = sbr.rel (%p350) target = $region44
        $region43: #{tpu_custom_call.1} parent=39 // pred_region
          %s353 = sand.u32 %s110, 1
          %s354 = scalar_lea.sflag [#allocation3], %s353
          %s355 = sand.u32 %s110, 1
          %s356 = smul.addr %s355, 16
          %s357 = scalar_lea.vmem [#allocation2], %s356
          %358 = dma.done %s354, 256
        $region44: #{tpu_custom_call.1} parent=39 // pred_fallthru
          _
      $region40: #{tpu_custom_call.1} parent=5 // pred_fallthru
        _
    $region6: #{tpu_custom_call.1} parent=1 // loop_footer
      %s16 = sadd.s32 1, %s12
    $region7: #{tpu_custom_call.1} parent=1 // loop_footer_branch
      %11 = sbr.rel target = $region3
    $region8: #{tpu_custom_call.1} parent=1 // loop_exit
      _
    %359 = vsyncpa [#allocation3], 1
    %s360 = scalar_lea.sflag [#allocation3], 1
    %361 = vsyncpa %s360, 1

// kernel: tpu_custom_call.1
$region0: #{tpu_custom_call.1}
  #allocation0 [shape = 'u32[]', space=smem, size = 0x4, offset = 0x4, fixed_abs, tag = 'smem constant byte address 0x4 - core index']
  #allocation1 [shape = 'u32[144,128]{1,0:T(1,128)}', space=vmem, size = 0x12000, scoped, tag = 'internal scratch']
  %s0 = inlined_call_operand.vmem [shape: f32[2,16,192], index: 0, kind: input, shape index: {}]
  %s1 = inlined_call_operand.vmem [shape: f32[192,64], index: 1, kind: input, shape index: {}]
  %s2 = inlined_call_operand.vmem [shape: f32[1,64], index: 2, kind: input, shape index: {}]
  %s3 = inlined_call_operand.hbm [shape: f32[2,16,64], index: 3, kind: output, shape index: {}]
  %s4 = sld [smem:[#allocation0]]
  $region45: #{tpu_custom_call.1} parent=0
    _
  %s6 = ssub.s32 1, %s4
  %s7 = scalar_select 0, %s6, %s4
  $region1: #{tpu_custom_call.1} parent=0
    #allocation2 [shape = 'u8[16384]{0}', space=vmem, size = 0x4000, scoped, tag = 'output window, operand 0']
    #allocation3 [shape = 's32[2]{0}', space=sflag, size = 0x8, scoped, tag = 'scoped memory for tpu_custom_call.1']
    %8 = vsyncpa [#allocation3], 0
    %s9 = scalar_lea.sflag [#allocation3], 1
    %10 = vsyncpa %s9, 0
    loop: start=0, step=1, limit=4
    $region2: #{tpu_custom_call.1} parent=1 // loop_pre_header
      _
    $region3: #{tpu_custom_call.1} parent=1 // loop_header
      %s12 = sphi 0, %s16
      %p13 = scmp.ge.s32.totalorder %s12, 4
      %s19 = sphi 0, %s31
      %s20 = sphi 0, %s27
      %s21 = sphi 0, %s19
      %s22 = sphi 0, %s20
      %s23 = sphi 0, %s21
      %s24 = sphi 0, %s22
      %s36 = sphi 0, %s38
      %s39 = sphi 0, %s36
      %s40 = sphi 0, %s39
      %s56 = sphi 0, %s40
      %s60 = sphi 0, %s60
      %s62 = sphi 0, %s60
      %s63 = sphi 0, %s62
      %s77 = sphi 0, %s63
      %s81 = sphi 0, %s81
      %s83 = sphi 0, %s81
      %s84 = sphi 0, %s83
      %s98 = sphi 0, %s84
      %s106 = sphi 0, %s108
      %s109 = sphi 0, %s106
      %s110 = sphi 0, %s109
      %s126 = sphi 0, %s110
    $region4: #{tpu_custom_call.1} parent=1 // loop_header_branch
      %15 = sbr.rel (%p13) target = $region8
    $region5: #{tpu_custom_call.1} parent=1 // loop_body
      %s17 = ssub.s32 %s12, 1
      %s18 = ssub.s32 %s12, 2
      %s25 = sadd.s32 1, %s20
      %p26 = scmp.ge.s32.totalorder %s25, 1
      %s27 = scalar_select %p26, 0, %s25
      %s28 = sadd.s32 1, %s19
      %s29 = scalar_select %p26, %s28, %s19
      %p30 = scmp.ge.s32.totalorder %s29, 2
      %s31 = scalar_select %p30, 0, %s29
      %s32 = ssub.s32 %s19, %s31
      %s33 = ssub.s32 %s20, %s27
      %s34 = sor.u32 %s32, %s33
      %p35 = scmp.eq.s32.totalorder %s34, 0
      %s37 = sadd.s32 %s36, 1
      %s38 = scalar_select %p35, %s36, %s37
      %p41 = pneg %p35
      %p42 = scmp.eq.s32.totalorder %s12, 1
      %p43 = por %p41, %p42
      %p44 = scmp.ne.s32.totalorder %s36, %s39
      %p45 = scmp.eq.s32.totalorder %s12, 0
      %p46 = por %p44, %p45
      %p47 = scmp.ne.s32.totalorder %s36, %s39
      %p48 = scmp.eq.s32.totalorder %s17, 1
      %p49 = por %p47, %p48
      %p50 = scmp.ne.s32.totalorder %s39, %s40
      %p51 = scmp.eq.s32.totalorder %s17, 0
      %p52 = por %p50, %p51
      %p53 = scmp.ne.s32.totalorder %s39, %s40
      %p54 = scmp.eq.s32.totalorder %s18, 1
      %p55 = por %p53, %p54
      %p57 = scmp.ne.s32.totalorder %s40, %s56
      %p58 = scmp.eq.s32.totalorder %s18, 0
      %p59 = por %p57, %p58
      %s61 = sadd.s32 %s60, 1
      %p64 = scmp.eq.s32.totalorder %s12, 1
      %p65 = scmp.ne.s32.totalorder %s60, %s62
      %p66 = scmp.eq.s32.totalorder %s12, 0
      %p67 = por %p65, %p66
      %p68 = scmp.ne.s32.totalorder %s60, %s62
      %p69 = scmp.eq.s32.totalorder %s17, 1
      %p70 = por %p68, %p69
      %p71 = scmp.ne.s32.totalorder %s62, %s63
      %p72 = scmp.eq.s32.totalorder %s17, 0
      %p73 = por %p71, %p72
      %p74 = scmp.ne.s32.totalorder %s62, %s63
      %p75 = scmp.eq.s32.totalorder %s18, 1
      %p76 = por %p74, %p75
      %p78 = scmp.ne.s32.totalorder %s63, %s77
      %p79 = scmp.eq.s32.totalorder %s18, 0
      %p80 = por %p78, %p79
      %s82 = sadd.s32 %s81, 1
      %p85 = scmp.eq.s32.totalorder %s12, 1
      %p86 = scmp.ne.s32.totalorder %s81, %s83
      %p87 = scmp.eq.s32.totalorder %s12, 0
      %p88 = por %p86, %p87
      %p89 = scmp.ne.s32.totalorder %s81, %s83
      %p90 = scmp.eq.s32.totalorder %s17, 1
      %p91 = por %p89, %p90
      %p92 = scmp.ne.s32.totalorder %s83, %s84
      %p93 = scmp.eq.s32.totalorder %s17, 0
      %p94 = por %p92, %p93
      %p95 = scmp.ne.s32.totalorder %s83, %s84
      %p96 = scmp.eq.s32.totalorder %s18, 1
      %p97 = por %p95, %p96
      %p99 = scmp.ne.s32.totalorder %s84, %s98
      %p100 = scmp.eq.s32.totalorder %s18, 0
      %p101 = por %p99, %p100
      %s102 = ssub.s32 %s19, %s31
      %s103 = ssub.s32 %s20, %s27
      %s104 = sor.u32 %s102, %s103
      %p105 = scmp.eq.s32.totalorder %s104, 0
      %s107 = sadd.s32 %s106, 1
      %s108 = scalar_select %p105, %s106, %s107
      %p111 = pneg %p105
      %p112 = scmp.eq.s32.totalorder %s12, 1
      %p113 = por %p111, %p112
      %p114 = scmp.ne.s32.totalorder %s106, %s109
      %p115 = scmp.eq.s32.totalorder %s12, 0
      %p116 = por %p114, %p115
      %p117 = scmp.ne.s32.totalorder %s106, %s109
      %p118 = scmp.eq.s32.totalorder %s17, 1
      %p119 = por %p117, %p118
      %p120 = scmp.ne.s32.totalorder %s109, %s110
      %p121 = scmp.eq.s32.totalorder %s17, 0
      %p122 = por %p120, %p121
      %p123 = scmp.ne.s32.totalorder %s109, %s110
      %p124 = scmp.eq.s32.totalorder %s18, 1
      %p125 = por %p123, %p124
      %p127 = scmp.ne.s32.totalorder %s110, %s126
      %p128 = scmp.eq.s32.totalorder %s18, 0
      %p129 = por %p127, %p128
      %p130 = scmp.le.s32.totalorder 1, %s12
      %p131 = scmp.lt.s32.totalorder %s12, 3
      %p132 = pnand %p130, %p131
      %p133 = pneg %p132
      // Predicated region
      $region9: #{tpu_custom_call.1} parent=5 // pred_check
        _
      $region10: #{tpu_custom_call.1} parent=5 // pred_check_branch
        %135 = sbr.rel (%p132) target = $region12
      $region11: #{tpu_custom_call.1} parent=5 // pred_region
        %s136 = ssub.s32 %s12, 1
        // Predicated region
        $region13: #{tpu_custom_call.1} parent=11 // pred_check
          %p137 = pneg %p73
        $region14: #{tpu_custom_call.1} parent=11 // pred_check_branch
          %139 = sbr.rel (%p137) target = $region16
        $region15: #{tpu_custom_call.1} parent=11 // pred_region
          _
        $region16: #{tpu_custom_call.1} parent=11 // pred_fallthru
          _
        // Predicated region
        $region17: #{tpu_custom_call.1} parent=11 // pred_check
          %p140 = pneg %p94
        $region18: #{tpu_custom_call.1} parent=11 // pred_check_branch
          %142 = sbr.rel (%p140) target = $region20
        $region19: #{tpu_custom_call.1} parent=11 // pred_region
          _
        $region20: #{tpu_custom_call.1} parent=11 // pred_fallthru
          _
      $region12: #{tpu_custom_call.1} parent=5 // pred_fallthru
        _
      %p143 = scmp.lt.s32.totalorder %s12, 2
      // Predicated region
      $region21: #{tpu_custom_call.1} parent=5 // pred_check
        %p144 = pneg %p143
      $region22: #{tpu_custom_call.1} parent=5 // pred_check_branch
        %146 = sbr.rel (%p144) target = $region24
      $region23: #{tpu_custom_call.1} parent=5 // pred_region
        // Predicated region
        $region25: #{tpu_custom_call.1} parent=23 // pred_check
          %p147 = pneg %p46
        $region26: #{tpu_custom_call.1} parent=23 // pred_check_branch
          %149 = sbr.rel (%p147) target = $region28
        $region27: #{tpu_custom_call.1} parent=23 // pred_region
          %s150 = smul.u32 2, %s20
          %p151 = scmp.lt.s32.totalorder %s19, 1
          %s152 = scalar_select %p151, %s19, 1
          %p153 = scmp.lt.s32.totalorder %s150, 1
          %s154 = scalar_select %p153, %s150, 1
          %s155 = smul.addr %s154, 2
          %s156 = smul.addr %s152, 4
          %s157 = sadd.s32 %s155, %s156
          %s158 = smul.addr %s157, 8
          %s159 = scalar_lea.vmem %s0, %s158
          %s160 = smul.u32 2, %s20
        $region28: #{tpu_custom_call.1} parent=23 // pred_fallthru
          _
      $region24: #{tpu_custom_call.1} parent=5 // pred_fallthru
        _
      %p161 = scmp.le.s32.totalorder 1, %s12
      %p162 = scmp.lt.s32.totalorder %s12, 3
      %p163 = pnand %p161, %p162
      %p164 = pneg %p163
      // Predicated region
      $region29: #{tpu_custom_call.1} parent=5 // pred_check
        _
      $region30: #{tpu_custom_call.1} parent=5 // pred_check_branch
        %166 = sbr.rel (%p163) target = $region32
      $region31: #{tpu_custom_call.1} parent=5 // pred_region
        %s167 = ssub.s32 %s12, 1
        %s168 = smul.u32 2, %s22
        %p169 = scmp.lt.s32.totalorder %s21, 1
        %s170 = scalar_select %p169, %s21, 1
        %p171 = scmp.lt.s32.totalorder %s168, 1
        %s172 = scalar_select %p171, %s168, 1
        %s173 = smul.addr %s172, 2
        %s174 = smul.addr %s170, 4
        %s175 = sadd.s32 %s173, %s174
        %s176 = smul.addr %s175, 8
        %s177 = scalar_lea.vmem %s0, %s176
        %p178 = pneg %p52
        %p179 = pneg %p49
        %p180 = pneg %p73
        %p181 = pneg %p70
        %p182 = pneg %p94
        %p183 = pneg %p91
        %p184 = pneg %p122
        %p185 = pneg %p119
        %s186 = sand.u32 %s109, 1
        %s187 = scalar_lea.sflag [#allocation3], %s186
        %s188 = sand.u32 %s109, 1
        %s189 = smul.addr %s188, 16
        %s190 = scalar_lea.vmem [#allocation2], %s189
        %s191 = smul.u32 2, %s22
        %p192 = scmp.lt.s32.totalorder %s21, 1
        %s193 = scalar_select %p192, %s21, 1
        %p194 = scmp.lt.s32.totalorder %s191, 1
        %s195 = scalar_select %p194, %s191, 1
        %s196 = smul.addr %s195, 2
        %s197 = smul.addr %s193, 4
        %s198 = sadd.s32 %s196, %s197
        %s199 = smul.addr %s198, 8
        %s200 = scalar_lea.vmem %s0, %s199
        %s201 = smul.u32 2, %s22
        %s202 = smul.u32 2, %s22
        %v203 = vld [vmem:[%s200] sm:$0xff]
        %v204 = vld [vmem:[%s200 + $0x8] sm:$0xff]
        %v205 = vld [vmem:[%s200 + $0x10] sm:$0xff]
        %v206 = vld [vmem:[%s200 + $0x18] sm:$0xff]
        %v207 = vld [vmem:[%s1] sm:$0xff]
        %v208 = vld [vmem:[%s1 + $0x8] sm:$0xff]
        %v209 = vld [vmem:[%s1 + $0x10] sm:$0xff]
        %v210 = vld [vmem:[%s1 + $0x18] sm:$0xff]
        %v211 = vld [vmem:[%s1 + $0x20] sm:$0xff]
        %v212 = vld [vmem:[%s1 + $0x28] sm:$0xff]
        %v213 = vld [vmem:[%s1 + $0x30] sm:$0xff]
        %v214 = vld [vmem:[%s1 + $0x38] sm:$0xff]
        %v215 = vld [vmem:[%s1 + $0x40] sm:$0xff]
        %v216 = vld [vmem:[%s1 + $0x48] sm:$0xff]
        %v217 = vld [vmem:[%s1 + $0x50] sm:$0xff]
        %v218 = vld [vmem:[%s1 + $0x58] sm:$0xff]
        %v219 = vld [vmem:[%s1 + $0x60] sm:$0xff]
        %v220 = vld [vmem:[%s1 + $0x68] sm:$0xff]
        %v221 = vld [vmem:[%s1 + $0x70] sm:$0xff]
        %v222 = vld [vmem:[%s1 + $0x78] sm:$0xff]
        %v223 = vld [vmem:[%s1 + $0x80] sm:$0xff]
        %v224 = vld [vmem:[%s1 + $0x88] sm:$0xff]
        %v225 = vld [vmem:[%s1 + $0x90] sm:$0xff]
        %v226 = vld [vmem:[%s1 + $0x98] sm:$0xff]
        %v227 = vld [vmem:[%s1 + $0xa0] sm:$0xff]
        %v228 = vld [vmem:[%s1 + $0xa8] sm:$0xff]
        %v229 = vld [vmem:[%s1 + $0xb0] sm:$0xff]
        %v230 = vld [vmem:[%s1 + $0xb8] sm:$0xff]
        %v231 = vld [vmem:[%s2] sm:$0x1]
        %v233 = vlaneseq
        %v234 = vshrl.u32 %v233, 7
        %v235 = vsub.s32 0, %v234
        %v236 = vrot.slane %v231, %v235
        %vm238 = vcmask 523264
        %v240 = vsel %vm238, %v204, 0
        %v243 = vsel %vm238, %v206, 0
        %245 = vmatprep.subr.mxu0 0.0
        %246 = vmatpush1.msra.mxu0 %v222
        %247 = vmatprep.subr.mxu0 0.0
        %248 = vmatpush1.msra.mxu0 %v221
        %249 = vmatprep.subr.mxu0 0.0
        %250 = vmatpush1.msra.mxu0 %v220
        %251 = vmatprep.subr.mxu0 0.0
        %252 = vmatpush1.msra.mxu0 %v219
        %253 = vmatprep.subr.mxu0 0.0
        %254 = vmatpush1.msra.mxu0 %v218
        %255 = vmatprep.subr.mxu0 0.0
        %256 = vmatpush1.msra.mxu0 %v217
        %257 = vmatprep.subr.mxu0 0.0
        %258 = vmatpush1.msra.mxu0 %v216
        %259 = vmatprep.subr.mxu0 0.0
        %260 = vmatpush1.msra.mxu0 %v215
        %261 = vmatprep.subr.mxu0 0.0
        %262 = vmatpush1.msra.mxu0 %v214
        %263 = vmatprep.subr.mxu0 0.0
        %264 = vmatpush1.msra.mxu0 %v213
        %265 = vmatprep.subr.mxu0 0.0
        %266 = vmatpush1.msra.mxu0 %v212
        %267 = vmatprep.subr.mxu0 0.0
        %268 = vmatpush1.msra.mxu0 %v211
        %269 = vmatprep.subr.mxu0 0.0
        %270 = vmatpush1.msra.mxu0 %v210
        %271 = vmatprep.subr.mxu0 0.0
        %272 = vmatpush1.msra.mxu0 %v209
        %273 = vmatprep.subr.mxu0 0.0
        %274 = vmatpush1.msra.mxu0 %v208
        %275 = vmatprep.subr.mxu0 0.0
        %276 = vmatpush1.msra.mxu0 %v207
        %277 = vmatprep.subr.mxu0 0.0
        %278 = vmatpush2.msra.mxu0 0.0
        %279 = vmatprep.subr.mxu0 0.0
        %280 = vmatpush2.msra.mxu0 0.0
        %281 = vmatprep.subr.mxu0 0.0
        %282 = vmatpush2.msra.mxu0 0.0
        %283 = vmatprep.subr.mxu0 0.0
        %284 = vmatpush2.msra.mxu0 0.0
        %285 = vmatprep.subr.mxu0 0.0
        %286 = vmatpush2.msra.mxu0 0.0
        %287 = vmatprep.subr.mxu0 0.0
        %288 = vmatpush2.msra.mxu0 0.0
        %289 = vmatprep.subr.mxu0 0.0
        %290 = vmatpush2.msra.mxu0 0.0
        %291 = vmatprep.subr.mxu0 0.0
        %292 = vmatpush2.msra.mxu0 0.0
        %293 = vmatprep.subr.mxu0 0.0
        %294 = vmatpush2.msra.mxu0 %v230
        %295 = vmatprep.subr.mxu0 0.0
        %296 = vmatpush2.msra.mxu0 %v229
        %297 = vmatprep.subr.mxu0 0.0
        %298 = vmatpush2.msra.mxu0 %v228
        %299 = vmatprep.subr.mxu0 0.0
        %300 = vmatpush2.msra.mxu0 %v227
        %301 = vmatprep.subr.mxu0 0.0
        %302 = vmatpush2.msra.mxu0 %v226
        %303 = vmatprep.subr.mxu0 0.0
        %304 = vmatpush2.msra.mxu0 %v225
        %305 = vmatprep.subr.mxu0 0.0
        %306 = vmatpush2.msra.mxu0 %v224
        %307 = vmatprep.subr.mxu0 0.0
        %308 = vmatpush2.msra.mxu0 %v223
        %309 = vmatprep.mubr.f32.mxu0 %v240
        %310 = vmatmul.mubr.f32.gmra.mxu0 %v203
        %v311 = vpop.f32.mrf.mxu0
        %v312 = vadd.f32 %v236, %v311
        %v313 = vpop.f32.mrf.mxu0
        %314 = vmatprep.mubr.f32.mxu0 %v243
        %315 = vmatmul.mubr.f32.gmra.mxu0 %v205
        %v316 = vpop.f32.mrf.mxu0
        %v317 = vadd.f32 %v236, %v316
        %v318 = vpop.f32.mrf.mxu0
        %319 = vdwg.mxu0
        %320 = vst.msk [vmem:[%s190] sm:$0xff] %vm238, %v312
        %321 = vst.msk [vmem:[%s190 + $0x8] sm:$0xff] %vm238, %v317
        %s322 = sand.u32 %s109, 1
        %s323 = scalar_lea.sflag [#allocation3], %s322
        %s324 = sand.u32 %s109, 1
        %s325 = smul.addr %s324, 16
        %s326 = scalar_lea.vmem [#allocation2], %s325
        // Predicated region
        $region33: #{tpu_custom_call.1} parent=31 // pred_check
          %p327 = pneg %p119
        $region34: #{tpu_custom_call.1} parent=31 // pred_check_branch
          %329 = sbr.rel (%p327) target = $region36
        $region35: #{tpu_custom_call.1} parent=31 // pred_region
          %s330 = smul.u32 2, %s22
          %s332 = ssub.s32 256, 256
          %333 = vsyncadd %s323, %s332
          %s334 = smul.addr %s21, 2
          %s335 = sadd.s32 %s330, %s334
          %s336 = smul.addr %s335, 128
          %s337 = scalar_lea.hbm %s3, %s336
          %s338 = sshll.u32 %s326, 4
          %s339 = int_to_ptr.vmem [resolvable:$true] %s338
          %344 = dma.vmem_to_hbm [thread:$0]  %s339, 256, %s337, %s323, 128, 128, 8
        $region36: #{tpu_custom_call.1} parent=31 // pred_fallthru
          _
      $region32: #{tpu_custom_call.1} parent=5 // pred_fallthru
        _
      %p345 = scmp.le.s32.totalorder 2, %s12
      // Predicated region
      $region37: #{tpu_custom_call.1} parent=5 // pred_check
        %p346 = pneg %p345
      $region38: #{tpu_custom_call.1} parent=5 // pred_check_branch
        %348 = sbr.rel (%p346) target = $region40
      $region39: #{tpu_custom_call.1} parent=5 // pred_region
        %s349 = ssub.s32 %s12, 2
        // Predicated region
        $region41: #{tpu_custom_call.1} parent=39 // pred_check
          %p350 = pneg %p125
        $region42: #{tpu_custom_call.1} parent=39 // pred_check_branch
          %352 = sbr.rel (%p350) target = $region44
        $region43: #{tpu_custom_call.1} parent=39 // pred_region
          %s353 = sand.u32 %s110, 1
          %s354 = scalar_lea.sflag [#allocation3], %s353
          %s355 = sand.u32 %s110, 1
          %s356 = smul.addr %s355, 16
          %s357 = scalar_lea.vmem [#allocation2], %s356
          %358 = dma.done %s354, 256
        $region44: #{tpu_custom_call.1} parent=39 // pred_fallthru
          _
      $region40: #{tpu_custom_call.1} parent=5 // pred_fallthru
        _
    $region6: #{tpu_custom_call.1} parent=1 // loop_footer
      %s16 = sadd.s32 1, %s12
    $region7: #{tpu_custom_call.1} parent=1 // loop_footer_branch
      %11 = sbr.rel target = $region3
    $region8: #{tpu_custom_call.1} parent=1 // loop_exit
      _
    %359 = vsyncpa [#allocation3], 1
    %s360 = scalar_lea.sflag [#allocation3], 1
    %361 = vsyncpa %s360, 1

</llo_original>
